<compile_context>
chip_gen: v7x
topology: tpu7x:2x2x1
jax: 0.10.0
libtpu: 0.0.40
codegen_flags: <defaults>
</compile_context>

<pallas_src>
import math
from functools import partial

import jax
import jax.numpy as jnp
from jax.experimental import pallas as pl
from jax.experimental.pallas import tpu as pltpu

LANE = 128   # lane width (last dim tiling)
SUB = 8      # sublane width (second-to-last dim tiling)


def _round_up(x, m):
    return ((x + m - 1) // m) * m


def _pad2(a, rows, cols):
    pr, pc = rows - a.shape[0], cols - a.shape[1]
    if pr or pc:
        a = jnp.pad(a, ((0, pr), (0, pc)))
    return a


def dqn_kernel(x_ref, w1_ref, b1_ref, w2_ref, b2_ref, w3_ref, b3_ref, o_ref):
    # fc1 + ReLU: bf16 operands -> MXU, f32 accumulate. Bias-add/ReLU in f32 so the
    # same kernel is correct & fast on v5e (no bf16 VPU); the cast back to bf16 just
    # feeds the next MXU matmul.
    h1 = jnp.dot(x_ref[...], w1_ref[...], preferred_element_type=jnp.float32)
    h1 = jnp.maximum(h1 + b1_ref[...], 0.0).astype(jnp.bfloat16)
    # fc2 + ReLU
    h2 = jnp.dot(h1, w2_ref[...], preferred_element_type=jnp.float32)
    h2 = jnp.maximum(h2 + b2_ref[...], 0.0).astype(jnp.bfloat16)
    # fc3 (no activation) -> action values
    o = jnp.dot(h2, w3_ref[...], preferred_element_type=jnp.float32) + b3_ref[...]
    o_ref[...] = o.astype(o_ref.dtype)


def prepare_dqn_params(params):
    """Pad feature dims to 128 lanes and cast matmul operands to bf16 ONCE.

    Do this at param-creation/update time; the returned padded dict is reused by every
    dqn_forward call so no per-forward pad/cast HLOs materialize new HBM weight copies.
    Weights are stored (in_features, out_features) — transposed vs. PyTorch nn.Linear —
    so the kernel computes x @ W + b.
    """
    w1, b1, w2, b2, w3, b3 = (params[k] for k in ("w1", "b1", "w2", "b2", "w3", "b3"))
    in_dim, fc1 = w1.shape
    fc2, nact = w2.shape[1], w3.shape[1]
    in_p, fc1_p, fc2_p, na_p = (_round_up(d, LANE) for d in (in_dim, fc1, fc2, nact))
    prepared = dict(
        w1=_pad2(w1, in_p, fc1_p).astype(jnp.bfloat16),
        w2=_pad2(w2, fc1_p, fc2_p).astype(jnp.bfloat16),
        w3=_pad2(w3, fc2_p, na_p).astype(jnp.bfloat16),
        b1=_pad2(b1, 1, fc1_p).astype(jnp.float32),
        b2=_pad2(b2, 1, fc2_p).astype(jnp.float32),
        b3=_pad2(b3, 1, na_p).astype(jnp.float32),
    )
    dims = dict(input_dim=in_dim, fc1_dims=fc1, fc2_dims=fc2, n_actions=nact)
    return prepared, dims


@partial(jax.jit, static_argnames=("fc1_dims", "fc2_dims", "n_actions", "tile_m"))
def dqn_forward(state, prepared, fc1_dims, fc2_dims, n_actions, tile_m=1024):
    """state: (batch, input_dim) f32; prepared: output of prepare_dqn_params.

    Returns (batch, n_actions) f32 action values.
    """
    batch, in_dim = state.shape
    w1, b1, w2, b2, w3, b3 = (prepared[k] for k in ("w1", "b1", "w2", "b2", "w3", "b3"))
    in_p, fc1_p = w1.shape
    fc2_p, na_p = w2.shape[1], w3.shape[1]

    # Batch tiling: big tiles amortize per-grid-step overhead, but keep >=2 grid steps
    # whenever batch allows so the "parallel" axis can shard across v7x's two TCs.
    batch8 = _round_up(batch, SUB)
    if batch8 >= 2 * SUB:
        tm = min(tile_m, _round_up(pl.cdiv(batch8, 2), SUB))
    else:
        tm = batch8
    batch_p = _round_up(batch, tm)
    grid_m = batch_p // tm

    # Pad/cast the state only (fuses under jit); bf16 halves the x HBM read.
    x_p = _pad2(state, batch_p, in_p).astype(jnp.bfloat16)

    # VMEM budget: resident weights/biases + double-buffered x/out tiles + h1/h2
    # intermediates, + 2 MiB headroom; capped at 32 MiB (v7x physical VMEM is 64 MiB).
    BF16, F32 = 2, 4
    w_bytes = (in_p * fc1_p + fc1_p * fc2_p + fc2_p * na_p) * BF16
    b_bytes = (fc1_p + fc2_p + na_p) * F32
    io_tiles = 2 * (tm * in_p * BF16) + 2 * (tm * na_p * F32)   # double-buffered
    interm = tm * (fc1_p + fc2_p) * (F32 + BF16)                # h1/h2 (f32 + bf16)
    vmem_limit = w_bytes + b_bytes + io_tiles + interm + (2 << 20)
    vmem_limit = int(min(max(vmem_limit, 4 << 20), 32 << 20))

    # Advisory cost estimate using REAL (unpadded) dims so XLA schedules overlap well.
    real_w = in_dim * fc1_dims + fc1_dims * fc2_dims + fc2_dims * n_actions
    flops = 2 * batch * real_w
    bytes_accessed = (batch * in_dim * BF16
                      + real_w * BF16
                      + (fc1_dims + fc2_dims + n_actions) * F32
                      + batch * n_actions * F32)
    cost = pl.CostEstimate(flops=flops, transcendentals=0,
                           bytes_accessed=bytes_accessed)

    # Weights/biases resident in VMEM across all grid steps (single DMA each).
    resident = lambda shape: pl.BlockSpec(shape, lambda i: (0, 0))

    out = pl.pallas_call(
        dqn_kernel,
        out_shape=jax.ShapeDtypeStruct((batch_p, na_p), jnp.float32),
        grid=(grid_m,),
        in_specs=[
            pl.BlockSpec((tm, in_p), lambda i: (i, 0)),      # x: tiled over batch
            resident((in_p, fc1_p)), resident((1, fc1_p)),   # w1, b1
            resident((fc1_p, fc2_p)), resident((1, fc2_p)),  # w2, b2
            resident((fc2_p, na_p)), resident((1, na_p)),    # w3, b3
        ],
        out_specs=pl.BlockSpec((tm, na_p), lambda i: (i, 0)),
        compiler_params=pltpu.CompilerParams(
            dimension_semantics=("parallel",),
            vmem_limit_bytes=vmem_limit,
        ),
        cost_estimate=cost,
    )(x_p, w1, b1, w2, b2, w3, b3)

    # Note: for very large batches on v5e one could pack the 4-action output into
    # dense 128-lane rows to cut the 32x output write inflation; kept lane-dense
    # 128-wide store here (masked 4-lane stores would be worse at these sizes).
    return out[:batch, :n_actions]


def init_linear_params(key, in_dim, out_dim):
    """Mimic PyTorch nn.Linear default init: U(-1/sqrt(in), 1/sqrt(in))."""
    kw, kb = jax.random.split(key)
    bound = 1.0 / math.sqrt(in_dim)
    # stored as (in, out) so the kernel does x @ W
    w = jax.random.uniform(kw, (in_dim, out_dim), jnp.float32, -bound, bound)
    b = jax.random.uniform(kb, (1, out_dim), jnp.float32, -bound, bound)
    return w, b


def make_dqn_params(key, input_dim, fc1_dims, fc2_dims, n_actions):
    k1, k2, k3 = jax.random.split(key, 3)
    w1, b1 = init_linear_params(k1, input_dim, fc1_dims)
    w2, b2 = init_linear_params(k2, fc1_dims, fc2_dims)
    w3, b3 = init_linear_params(k3, fc2_dims, n_actions)
    return dict(w1=w1, b1=b1, w2=w2, b2=b2, w3=w3, b3=b3)


def dqn_reference_f32(state, p):
    h1 = jnp.maximum(state @ p["w1"] + p["b1"], 0.0)
    h2 = jnp.maximum(h1 @ p["w2"] + p["b2"], 0.0)
    return h2 @ p["w3"] + p["b3"]


def dqn_reference_bf16(state, p):
    """Matches the kernel's precision recipe (bf16 matmul operands, f32 accum/bias)."""
    xb = state.astype(jnp.bfloat16)
    h1 = jnp.maximum(
        jnp.dot(xb, p["w1"].astype(jnp.bfloat16),
                preferred_element_type=jnp.float32) + p["b1"], 0.0)
    h2 = jnp.maximum(
        jnp.dot(h1.astype(jnp.bfloat16), p["w2"].astype(jnp.bfloat16),
                preferred_element_type=jnp.float32) + p["b2"], 0.0)
    return jnp.dot(h2.astype(jnp.bfloat16), p["w3"].astype(jnp.bfloat16),
                   preferred_element_type=jnp.float32) + p["b3"]


if __name__ == "__main__":
    # Small shapes consistent with the module: input_dims=(16,), fc1=32, fc2=32, n_actions=4
    batch, input_dim, fc1_dims, fc2_dims, n_actions = 8, 16, 32, 32, 4

    key = jax.random.PRNGKey(0)
    kparams, kstate = jax.random.split(key)
    params = make_dqn_params(kparams, input_dim, fc1_dims, fc2_dims, n_actions)
    state = jax.random.normal(kstate, (batch, input_dim), jnp.float32)

    # One-time pad/cast of the weights (hoisted out of the per-call path).
    prepared, dims = prepare_dqn_params(params)

    actions = dqn_forward(state, prepared,
                          fc1_dims=dims["fc1_dims"],
                          fc2_dims=dims["fc2_dims"],
                          n_actions=dims["n_actions"])
    actions = jax.block_until_ready(actions)
    assert actions.shape == (batch, n_actions)

    # Tight check against a same-precision (bf16-operand) reference.
    ref_bf16 = dqn_reference_bf16(state, params)
    assert jnp.allclose(actions, ref_bf16, atol=1e-3, rtol=1e-3)

    # Loose sanity check against the full-f32 PyTorch-equivalent forward.
    ref_f32 = dqn_reference_f32(state, params)
    assert jnp.allclose(actions, ref_f32, atol=5e-2, rtol=5e-2)

    # TODO(synk): Adam optimizer / MSELoss / device placement from the PyTorch module
    # are training-time concerns, not part of the forward pass, and are not kernelized.
    print("KERNEL_OK")
</pallas_src>

<mosaic_0001>
module attributes {stable_mosaic.version = 11 : i64} {
  func.func @dqn_kernel(%arg0: i32, %arg1: memref<8x128xbf16, #tpu.memory_space<vmem>>, %arg2: memref<128x128xbf16, #tpu.memory_space<vmem>>, %arg3: memref<1x128xf32, #tpu.memory_space<vmem>>, %arg4: memref<128x128xbf16, #tpu.memory_space<vmem>>, %arg5: memref<1x128xf32, #tpu.memory_space<vmem>>, %arg6: memref<128x128xbf16, #tpu.memory_space<vmem>>, %arg7: memref<1x128xf32, #tpu.memory_space<vmem>>, %arg8: memref<8x128xf32, #tpu.memory_space<vmem>>) attributes {dimension_semantics = [#tpu.dimension_semantics<parallel>], iteration_bounds = array<i64: 1>, scalar_prefetch = 0 : i64, scratch_operands = 0 : i64, tpu.core_type = #tpu.core_type<tc>, window_params = [{transform_indices = @transform_0, window_bounds = array<i64: 8, 128>}, {pipeline_mode = #tpu.pipeline_mode<synchronous>, transform_indices = @transform_1, window_bounds = array<i64: 128, 128>}, {pipeline_mode = #tpu.pipeline_mode<synchronous>, transform_indices = @transform_2, window_bounds = array<i64: 1, 128>}, {pipeline_mode = #tpu.pipeline_mode<synchronous>, transform_indices = @transform_3, window_bounds = array<i64: 128, 128>}, {pipeline_mode = #tpu.pipeline_mode<synchronous>, transform_indices = @transform_4, window_bounds = array<i64: 1, 128>}, {pipeline_mode = #tpu.pipeline_mode<synchronous>, transform_indices = @transform_5, window_bounds = array<i64: 128, 128>}, {pipeline_mode = #tpu.pipeline_mode<synchronous>, transform_indices = @transform_6, window_bounds = array<i64: 1, 128>}, {transform_indices = @transform_7, window_bounds = array<i64: 8, 128>}]} {
    %c0 = arith.constant 0 : index
    %c0_0 = arith.constant 0 : index
    %0 = vector.load %arg1[%c0, %c0_0] : memref<8x128xbf16, #tpu.memory_space<vmem>>, vector<8x128xbf16>
    %c0_1 = arith.constant 0 : index
    %c0_2 = arith.constant 0 : index
    %1 = vector.load %arg2[%c0_1, %c0_2] : memref<128x128xbf16, #tpu.memory_space<vmem>>, vector<128x128xbf16>
    %cst = arith.constant dense<0.000000e+00> : vector<8x128xf32>
    %2 = tpu.matmul %0, %1, %cst {dimension_numbers = #tpu.dot_dimension_numbers<[1], [0], [0], [1], [0, 0, 1, 1], [], []>} : vector<8x128xbf16>, vector<128x128xbf16>, vector<8x128xf32> -> vector<8x128xf32>
    %c0_3 = arith.constant 0 : index
    %c0_4 = arith.constant 0 : index
    %3 = vector.load %arg3[%c0_3, %c0_4] : memref<1x128xf32, #tpu.memory_space<vmem>>, vector<1x128xf32>
    %4 = vector.broadcast %3 : vector<1x128xf32> to vector<8x128xf32>
    %5 = arith.addf %2, %4 : vector<8x128xf32>
    %cst_5 = arith.constant 0.000000e+00 : f32
    %6 = vector.broadcast %cst_5 : f32 to vector<8x128xf32>
    %7 = arith.maximumf %5, %6 : vector<8x128xf32>
    %8 = arith.truncf %7 : vector<8x128xf32> to vector<8x128xbf16>
    %c0_6 = arith.constant 0 : index
    %c0_7 = arith.constant 0 : index
    %9 = vector.load %arg4[%c0_6, %c0_7] : memref<128x128xbf16, #tpu.memory_space<vmem>>, vector<128x128xbf16>
    %cst_8 = arith.constant dense<0.000000e+00> : vector<8x128xf32>
    %10 = tpu.matmul %8, %9, %cst_8 {dimension_numbers = #tpu.dot_dimension_numbers<[1], [0], [0], [1], [0, 0, 1, 1], [], []>} : vector<8x128xbf16>, vector<128x128xbf16>, vector<8x128xf32> -> vector<8x128xf32>
    %c0_9 = arith.constant 0 : index
    %c0_10 = arith.constant 0 : index
    %11 = vector.load %arg5[%c0_9, %c0_10] : memref<1x128xf32, #tpu.memory_space<vmem>>, vector<1x128xf32>
    %12 = vector.broadcast %11 : vector<1x128xf32> to vector<8x128xf32>
    %13 = arith.addf %10, %12 : vector<8x128xf32>
    %cst_11 = arith.constant 0.000000e+00 : f32
    %14 = vector.broadcast %cst_11 : f32 to vector<8x128xf32>
    %15 = arith.maximumf %13, %14 : vector<8x128xf32>
    %16 = arith.truncf %15 : vector<8x128xf32> to vector<8x128xbf16>
    %c0_12 = arith.constant 0 : index
    %c0_13 = arith.constant 0 : index
    %17 = vector.load %arg6[%c0_12, %c0_13] : memref<128x128xbf16, #tpu.memory_space<vmem>>, vector<128x128xbf16>
    %cst_14 = arith.constant dense<0.000000e+00> : vector<8x128xf32>
    %18 = tpu.matmul %16, %17, %cst_14 {dimension_numbers = #tpu.dot_dimension_numbers<[1], [0], [0], [1], [0, 0, 1, 1], [], []>} : vector<8x128xbf16>, vector<128x128xbf16>, vector<8x128xf32> -> vector<8x128xf32>
    %c0_15 = arith.constant 0 : index
    %c0_16 = arith.constant 0 : index
    %19 = vector.load %arg7[%c0_15, %c0_16] : memref<1x128xf32, #tpu.memory_space<vmem>>, vector<1x128xf32>
    %20 = vector.broadcast %19 : vector<1x128xf32> to vector<8x128xf32>
    %21 = arith.addf %18, %20 : vector<8x128xf32>
    %c0_17 = arith.constant 0 : index
    %c0_18 = arith.constant 0 : index
    %22 = vector.load %arg8[%c0_17, %c0_18] : memref<8x128xf32, #tpu.memory_space<vmem>>, vector<8x128xf32>
    tpu.vector_store %arg8[%c0_17, %c0_18], %21 {strides = array<i32>} : memref<8x128xf32, #tpu.memory_space<vmem>>, vector<8x128xf32>,
    return
  }
  func.func @transform_0(%arg0: i32) -> (i32, i32) {
    %c0_i32 = arith.constant 0 : i32
    %c0_i32_0 = arith.constant 0 : i32
    return %arg0, %c0_i32 : i32, i32
  }
  func.func @transform_1(%arg0: i32) -> (i32, i32) {
    %c0_i32 = arith.constant 0 : i32
    %c0_i32_0 = arith.constant 0 : i32
    %c0_i32_1 = arith.constant 0 : i32
    return %c0_i32, %c0_i32_0 : i32, i32
  }
  func.func @transform_2(%arg0: i32) -> (i32, i32) {
    %c0_i32 = arith.constant 0 : i32
    %c0_i32_0 = arith.constant 0 : i32
    %c0_i32_1 = arith.constant 0 : i32
    return %c0_i32, %c0_i32_0 : i32, i32
  }
  func.func @transform_3(%arg0: i32) -> (i32, i32) {
    %c0_i32 = arith.constant 0 : i32
    %c0_i32_0 = arith.constant 0 : i32
    %c0_i32_1 = arith.constant 0 : i32
    return %c0_i32, %c0_i32_0 : i32, i32
  }
  func.func @transform_4(%arg0: i32) -> (i32, i32) {
    %c0_i32 = arith.constant 0 : i32
    %c0_i32_0 = arith.constant 0 : i32
    %c0_i32_1 = arith.constant 0 : i32
    return %c0_i32, %c0_i32_0 : i32, i32
  }
  func.func @transform_5(%arg0: i32) -> (i32, i32) {
    %c0_i32 = arith.constant 0 : i32
    %c0_i32_0 = arith.constant 0 : i32
    %c0_i32_1 = arith.constant 0 : i32
    return %c0_i32, %c0_i32_0 : i32, i32
  }
  func.func @transform_6(%arg0: i32) -> (i32, i32) {
    %c0_i32 = arith.constant 0 : i32
    %c0_i32_0 = arith.constant 0 : i32
    %c0_i32_1 = arith.constant 0 : i32
    return %c0_i32, %c0_i32_0 : i32, i32
  }
  func.func @transform_7(%arg0: i32) -> (i32, i32) {
    %c0_i32 = arith.constant 0 : i32
    %c0_i32_0 = arith.constant 0 : i32
    return %arg0, %c0_i32 : i32, i32
  }
}

</mosaic_0001>

<llo_original>
// kernel: dqn_forward.1
$region0: #{dqn_forward.1}
  #allocation0 [shape = 'u32[]', space=smem, size = 0x4, offset = 0x4, fixed_abs, tag = 'smem constant byte address 0x4 - core index']
  #allocation1 [shape = 'u32[144,128]{1,0:T(1,128)}', space=vmem, size = 0x12000, scoped, tag = 'internal scratch']
  %s0 = inlined_call_operand.vmem [shape: bf16[8,128], index: 0, kind: input, shape index: {}]
  %s1 = inlined_call_operand.hbm [shape: bf16[128,128], index: 1, kind: input, shape index: {}]
  %s2 = inlined_call_operand.vmem [shape: f32[1,128], index: 2, kind: input, shape index: {}]
  %s3 = inlined_call_operand.hbm [shape: bf16[128,128], index: 3, kind: input, shape index: {}]
  %s4 = inlined_call_operand.vmem [shape: f32[1,128], index: 4, kind: input, shape index: {}]
  %s5 = inlined_call_operand.hbm [shape: bf16[128,128], index: 5, kind: input, shape index: {}]
  %s6 = inlined_call_operand.vmem [shape: f32[1,128], index: 6, kind: input, shape index: {}]
  %s7 = inlined_call_operand.vmem [shape: f32[8,128], index: 7, kind: output, shape index: {}]
  %s8 = sld [smem:[#allocation0]]
  $region50: #{dqn_forward.1} parent=0
    _
  %s10 = ssub.s32 1, %s8
  %s11 = scalar_select 0, %s10, %s8
  $region1: #{dqn_forward.1} parent=0
    #allocation2 [shape = 'u8[32768]{0}', space=vmem, size = 0x8000, scoped, tag = 'input window, operand 1, single buffered']
    #allocation3 [shape = 's32[1]{0}', space=sflag, size = 0x4, scoped, tag = 'scoped memory for dqn_forward.1']
    #allocation4 [shape = 'u8[32768]{0}', space=vmem, size = 0x8000, scoped, tag = 'input window, operand 3, single buffered']
    #allocation5 [shape = 's32[1]{0}', space=sflag, size = 0x4, scoped, tag = 'scoped memory for dqn_forward.1']
    #allocation6 [shape = 'u8[32768]{0}', space=vmem, size = 0x8000, scoped, tag = 'input window, operand 5, single buffered']
    %12 = vsyncpa [#allocation3], 0
    %13 = vsyncpa [#allocation5], 0
    // Predicated region
    $region2: #{dqn_forward.1} parent=1 // pred_check
      _
    $region3: #{dqn_forward.1} parent=1 // pred_check_branch
      %15 = sbr.rel (0) target = $region5
    $region4: #{dqn_forward.1} parent=1 // pred_region
      _
    $region5: #{dqn_forward.1} parent=1 // pred_fallthru
      _
    // Predicated region
    $region6: #{dqn_forward.1} parent=1 // pred_check
      _
    $region7: #{dqn_forward.1} parent=1 // pred_check_branch
      %17 = sbr.rel (0) target = $region9
    $region8: #{dqn_forward.1} parent=1 // pred_region
      %s19 = ssub.s32 1024, 1024
      %20 = vsyncadd [#allocation3], %s19
      %s21 = sshll.u32 [#allocation2], 4
      %s22 = int_to_ptr.vmem [resolvable:$true] %s21
      %27 = dma.hbm_to_vmem [thread:$0]  %s1, 1024, %s22, [#allocation3], 64, 64, 4
    $region9: #{dqn_forward.1} parent=1 // pred_fallthru
      _
    // Predicated region
    $region10: #{dqn_forward.1} parent=1 // pred_check
      _
    $region11: #{dqn_forward.1} parent=1 // pred_check_branch
      %29 = sbr.rel (0) target = $region13
    $region12: #{dqn_forward.1} parent=1 // pred_region
      _
    $region13: #{dqn_forward.1} parent=1 // pred_fallthru
      _
    // Predicated region
    $region14: #{dqn_forward.1} parent=1 // pred_check
      _
    $region15: #{dqn_forward.1} parent=1 // pred_check_branch
      %31 = sbr.rel (0) target = $region17
    $region16: #{dqn_forward.1} parent=1 // pred_region
      %s33 = ssub.s32 1024, 1024
      %34 = vsyncadd [#allocation5], %s33
      %s35 = sshll.u32 [#allocation4], 4
      %s36 = int_to_ptr.vmem [resolvable:$true] %s35
      %41 = dma.hbm_to_vmem [thread:$0]  %s3, 1024, %s36, [#allocation5], 64, 64, 4
    $region17: #{dqn_forward.1} parent=1 // pred_fallthru
      _
    // Predicated region
    $region18: #{dqn_forward.1} parent=1 // pred_check
      _
    $region19: #{dqn_forward.1} parent=1 // pred_check_branch
      %43 = sbr.rel (0) target = $region21
    $region20: #{dqn_forward.1} parent=1 // pred_region
      _
    $region21: #{dqn_forward.1} parent=1 // pred_fallthru
      _
    // Predicated region
    $region22: #{dqn_forward.1} parent=1 // pred_check
      _
    $region23: #{dqn_forward.1} parent=1 // pred_check_branch
      %45 = sbr.rel (0) target = $region25
    $region24: #{dqn_forward.1} parent=1 // pred_region
      %s47 = ssub.s32 1024, 1024
      %48 = vsyncadd [#allocation5], %s47
      %s49 = sshll.u32 [#allocation6], 4
      %s50 = int_to_ptr.vmem [resolvable:$true] %s49
      %55 = dma.hbm_to_vmem [thread:$0]  %s5, 1024, %s50, [#allocation5], 64, 64, 4
    $region25: #{dqn_forward.1} parent=1 // pred_fallthru
      _
    // Predicated region
    $region26: #{dqn_forward.1} parent=1 // pred_check
      _
    $region27: #{dqn_forward.1} parent=1 // pred_check_branch
      %57 = sbr.rel (0) target = $region29
    $region28: #{dqn_forward.1} parent=1 // pred_region
      _
    $region29: #{dqn_forward.1} parent=1 // pred_fallthru
      _
    // Predicated region
    $region30: #{dqn_forward.1} parent=1 // pred_check
      _
    $region31: #{dqn_forward.1} parent=1 // pred_check_branch
      %59 = sbr.rel (0) target = $region33
    $region32: #{dqn_forward.1} parent=1 // pred_region
      %60 = dma.done [#allocation3], 1024
    $region33: #{dqn_forward.1} parent=1 // pred_fallthru
      _
    // Predicated region
    $region34: #{dqn_forward.1} parent=1 // pred_check
      _
    $region35: #{dqn_forward.1} parent=1 // pred_check_branch
      %62 = sbr.rel (0) target = $region37
    $region36: #{dqn_forward.1} parent=1 // pred_region
      %63 = dma.done [#allocation5], 1024
    $region37: #{dqn_forward.1} parent=1 // pred_fallthru
      _
    // Predicated region
    $region38: #{dqn_forward.1} parent=1 // pred_check
      _
    $region39: #{dqn_forward.1} parent=1 // pred_check_branch
      %65 = sbr.rel (0) target = $region41
    $region40: #{dqn_forward.1} parent=1 // pred_region
      %66 = dma.done [#allocation5], 1024
    $region41: #{dqn_forward.1} parent=1 // pred_fallthru
      _
    %v68 = vld [vmem:[%s0] sm:$0xf]
    %v69 = vld [vmem:[#allocation2] sm:$0xf]
    %v70 = vld [vmem:[#allocation2 + $0x4] sm:$0xf]
    %v71 = vld [vmem:[#allocation2 + $0x8] sm:$0xf]
    %v72 = vld [vmem:[#allocation2 + $0xc] sm:$0xf]
    %v73 = vld [vmem:[#allocation2 + $0x10] sm:$0xf]
    %v74 = vld [vmem:[#allocation2 + $0x14] sm:$0xf]
    %v75 = vld [vmem:[#allocation2 + $0x18] sm:$0xf]
    %v76 = vld [vmem:[#allocation2 + $0x1c] sm:$0xf]
    %v77 = vld [vmem:[#allocation2 + $0x20] sm:$0xf]
    %v78 = vld [vmem:[#allocation2 + $0x24] sm:$0xf]
    %v79 = vld [vmem:[#allocation2 + $0x28] sm:$0xf]
    %v80 = vld [vmem:[#allocation2 + $0x2c] sm:$0xf]
    %v81 = vld [vmem:[#allocation2 + $0x30] sm:$0xf]
    %v82 = vld [vmem:[#allocation2 + $0x34] sm:$0xf]
    %v83 = vld [vmem:[#allocation2 + $0x38] sm:$0xf]
    %v84 = vld [vmem:[#allocation2 + $0x3c] sm:$0xf]
    %v85 = vld [vmem:[%s2] sm:$0x1]
    %v87 = vlaneseq
    %v88 = vshrl.u32 %v87, 7
    %v89 = vsub.s32 0, %v88
    %v90 = vrot.slane %v85, %v89
    %v108 = vunpack.c.l.b16 %v69
    %v109 = vunpack.c.l.b16 %v70
    %v110 = vunpack.c.l.b16 %v71
    %v111 = vunpack.c.l.b16 %v72
    %v112 = vunpack.c.l.b16 %v73
    %v113 = vunpack.c.l.b16 %v74
    %v114 = vunpack.c.l.b16 %v75
    %v115 = vunpack.c.l.b16 %v76
    %v116 = vunpack.c.l.b16 %v77
    %v117 = vunpack.c.l.b16 %v78
    %v118 = vunpack.c.l.b16 %v79
    %v119 = vunpack.c.l.b16 %v80
    %v120 = vunpack.c.l.b16 %v81
    %v121 = vunpack.c.l.b16 %v82
    %v122 = vunpack.c.l.b16 %v83
    %v123 = vunpack.c.l.b16 %v84
    %v124 = vpack.c.b16 %v109, %v108
    %v125 = vpack.c.b16 %v111, %v110
    %v126 = vpack.c.b16 %v113, %v112
    %v127 = vpack.c.b16 %v115, %v114
    %v128 = vpack.c.b16 %v117, %v116
    %v129 = vpack.c.b16 %v119, %v118
    %v130 = vpack.c.b16 %v121, %v120
    %v131 = vpack.c.b16 %v123, %v122
    %140 = vmatprep.subr.bf16.mxu0 0
    %141 = vmatpush1.bf16.msra.mxu0 %v124
    %142 = vmatprep.subr.bf16.mxu0 0
    %143 = vmatpush1.bf16.msra.mxu0 %v125
    %144 = vmatprep.subr.bf16.mxu0 0
    %145 = vmatpush1.bf16.msra.mxu0 %v126
    %146 = vmatprep.subr.bf16.mxu0 0
    %147 = vmatpush1.bf16.msra.mxu0 %v127
    %148 = vmatprep.subr.bf16.mxu0 0
    %149 = vmatpush1.bf16.msra.mxu0 %v128
    %150 = vmatprep.subr.bf16.mxu0 0
    %151 = vmatpush1.bf16.msra.mxu0 %v129
    %152 = vmatprep.subr.bf16.mxu0 0
    %153 = vmatpush1.bf16.msra.mxu0 %v130
    %154 = vmatprep.subr.bf16.mxu0 0
    %155 = vmatpush1.bf16.msra.mxu0 %v131
    %156 = vmatprep.subr.bf16.mxu0 0
    %157 = vmatpush1.bf16.msra.mxu0 0
    %158 = vmatprep.subr.bf16.mxu0 0
    %159 = vmatpush1.bf16.msra.mxu0 0
    %160 = vmatprep.subr.bf16.mxu0 0
    %161 = vmatpush1.bf16.msra.mxu0 0
    %162 = vmatprep.subr.bf16.mxu0 0
    %163 = vmatpush1.bf16.msra.mxu0 0
    %164 = vmatprep.subr.bf16.mxu0 0
    %165 = vmatpush1.bf16.msra.mxu0 0
    %166 = vmatprep.subr.bf16.mxu0 0
    %167 = vmatpush1.bf16.msra.mxu0 0
    %168 = vmatprep.subr.bf16.mxu0 0
    %169 = vmatpush1.bf16.msra.mxu0 0
    %170 = vmatprep.subr.bf16.mxu0 0
    %171 = vmatpush1.bf16.msra.mxu0 0
    %172 = vmatprep.mubr.bf16.mxu0 0
    %173 = vmatmul.mubr.bf16.gmra.mrb[0].mxu0 %v68
    %v174 = vpop.f32.mrb[0].mxu0
    %v175 = vadd.f32 %v90, %v174
    %v176 = vpop.f32.mrb[0].mxu0
    %v177 = vpop.f32.mrb[0].mxu0
    %v178 = vpop.f32.mrb[0].mxu0
    %179 = vdwg.mxu0
    %v180 = vmax.f32 %v175, 0.0
    %v181 = vpack.c.bf16 %v180, %v180
    %v182 = vld [vmem:[#allocation4] sm:$0xf]
    %v183 = vld [vmem:[#allocation4 + $0x4] sm:$0xf]
    %v184 = vld [vmem:[#allocation4 + $0x8] sm:$0xf]
    %v185 = vld [vmem:[#allocation4 + $0xc] sm:$0xf]
    %v186 = vld [vmem:[#allocation4 + $0x10] sm:$0xf]
    %v187 = vld [vmem:[#allocation4 + $0x14] sm:$0xf]
    %v188 = vld [vmem:[#allocation4 + $0x18] sm:$0xf]
    %v189 = vld [vmem:[#allocation4 + $0x1c] sm:$0xf]
    %v190 = vld [vmem:[#allocation4 + $0x20] sm:$0xf]
    %v191 = vld [vmem:[#allocation4 + $0x24] sm:$0xf]
    %v192 = vld [vmem:[#allocation4 + $0x28] sm:$0xf]
    %v193 = vld [vmem:[#allocation4 + $0x2c] sm:$0xf]
    %v194 = vld [vmem:[#allocation4 + $0x30] sm:$0xf]
    %v195 = vld [vmem:[#allocation4 + $0x34] sm:$0xf]
    %v196 = vld [vmem:[#allocation4 + $0x38] sm:$0xf]
    %v197 = vld [vmem:[#allocation4 + $0x3c] sm:$0xf]
    %v198 = vld [vmem:[%s4] sm:$0x1]
    %v200 = vlaneseq
    %v201 = vshrl.u32 %v200, 7
    %v202 = vsub.s32 0, %v201
    %v203 = vrot.slane %v198, %v202
    %v221 = vunpack.c.l.b16 %v182
    %v222 = vunpack.c.l.b16 %v183
    %v223 = vunpack.c.l.b16 %v184
    %v224 = vunpack.c.l.b16 %v185
    %v225 = vunpack.c.l.b16 %v186
    %v226 = vunpack.c.l.b16 %v187
    %v227 = vunpack.c.l.b16 %v188
    %v228 = vunpack.c.l.b16 %v189
    %v229 = vunpack.c.l.b16 %v190
    %v230 = vunpack.c.l.b16 %v191
    %v231 = vunpack.c.l.b16 %v192
    %v232 = vunpack.c.l.b16 %v193
    %v233 = vunpack.c.l.b16 %v194
    %v234 = vunpack.c.l.b16 %v195
    %v235 = vunpack.c.l.b16 %v196
    %v236 = vunpack.c.l.b16 %v197
    %v237 = vpack.c.b16 %v222, %v221
    %v238 = vpack.c.b16 %v224, %v223
    %v239 = vpack.c.b16 %v226, %v225
    %v240 = vpack.c.b16 %v228, %v227
    %v241 = vpack.c.b16 %v230, %v229
    %v242 = vpack.c.b16 %v232, %v231
    %v243 = vpack.c.b16 %v234, %v233
    %v244 = vpack.c.b16 %v236, %v235
    %253 = vmatprep.subr.bf16.mxu0 0
    %254 = vmatpush1.bf16.msra.mxu0 %v237
    %255 = vmatprep.subr.bf16.mxu0 0
    %256 = vmatpush1.bf16.msra.mxu0 %v238
    %257 = vmatprep.subr.bf16.mxu0 0
    %258 = vmatpush1.bf16.msra.mxu0 %v239
    %259 = vmatprep.subr.bf16.mxu0 0
    %260 = vmatpush1.bf16.msra.mxu0 %v240
    %261 = vmatprep.subr.bf16.mxu0 0
    %262 = vmatpush1.bf16.msra.mxu0 %v241
    %263 = vmatprep.subr.bf16.mxu0 0
    %264 = vmatpush1.bf16.msra.mxu0 %v242
    %265 = vmatprep.subr.bf16.mxu0 0
    %266 = vmatpush1.bf16.msra.mxu0 %v243
    %267 = vmatprep.subr.bf16.mxu0 0
    %268 = vmatpush1.bf16.msra.mxu0 %v244
    %269 = vmatprep.subr.bf16.mxu0 0
    %270 = vmatpush1.bf16.msra.mxu0 0
    %271 = vmatprep.subr.bf16.mxu0 0
    %272 = vmatpush1.bf16.msra.mxu0 0
    %273 = vmatprep.subr.bf16.mxu0 0
    %274 = vmatpush1.bf16.msra.mxu0 0
    %275 = vmatprep.subr.bf16.mxu0 0
    %276 = vmatpush1.bf16.msra.mxu0 0
    %277 = vmatprep.subr.bf16.mxu0 0
    %278 = vmatpush1.bf16.msra.mxu0 0
    %279 = vmatprep.subr.bf16.mxu0 0
    %280 = vmatpush1.bf16.msra.mxu0 0
    %281 = vmatprep.subr.bf16.mxu0 0
    %282 = vmatpush1.bf16.msra.mxu0 0
    %283 = vmatprep.subr.bf16.mxu0 0
    %284 = vmatpush1.bf16.msra.mxu0 0
    %285 = vmatprep.mubr.bf16.mxu0 0
    %286 = vmatmul.mubr.bf16.gmra.mrb[0].mxu0 %v181
    %v287 = vpop.f32.mrb[0].mxu0
    %v288 = vadd.f32 %v203, %v287
    %v289 = vpop.f32.mrb[0].mxu0
    %v290 = vpop.f32.mrb[0].mxu0
    %v291 = vpop.f32.mrb[0].mxu0
    %292 = vdwg.mxu0
    %v293 = vmax.f32 %v288, 0.0
    %v294 = vpack.c.bf16 %v293, %v293
    %v295 = vld [vmem:[#allocation6] sm:$0xf]
    %v296 = vld [vmem:[#allocation6 + $0x4] sm:$0xf]
    %v297 = vld [vmem:[#allocation6 + $0x8] sm:$0xf]
    %v298 = vld [vmem:[#allocation6 + $0xc] sm:$0xf]
    %v299 = vld [vmem:[#allocation6 + $0x10] sm:$0xf]
    %v300 = vld [vmem:[#allocation6 + $0x14] sm:$0xf]
    %v301 = vld [vmem:[#allocation6 + $0x18] sm:$0xf]
    %v302 = vld [vmem:[#allocation6 + $0x1c] sm:$0xf]
    %v303 = vld [vmem:[#allocation6 + $0x20] sm:$0xf]
    %v304 = vld [vmem:[#allocation6 + $0x24] sm:$0xf]
    %v305 = vld [vmem:[#allocation6 + $0x28] sm:$0xf]
    %v306 = vld [vmem:[#allocation6 + $0x2c] sm:$0xf]
    %v307 = vld [vmem:[#allocation6 + $0x30] sm:$0xf]
    %v308 = vld [vmem:[#allocation6 + $0x34] sm:$0xf]
    %v309 = vld [vmem:[#allocation6 + $0x38] sm:$0xf]
    %v310 = vld [vmem:[#allocation6 + $0x3c] sm:$0xf]
    %v311 = vld [vmem:[%s6] sm:$0x1]
    %v313 = vlaneseq
    %v314 = vshrl.u32 %v313, 7
    %v315 = vsub.s32 0, %v314
    %v316 = vrot.slane %v311, %v315
    %v334 = vunpack.c.l.b16 %v295
    %v335 = vunpack.c.l.b16 %v296
    %v336 = vunpack.c.l.b16 %v297
    %v337 = vunpack.c.l.b16 %v298
    %v338 = vunpack.c.l.b16 %v299
    %v339 = vunpack.c.l.b16 %v300
    %v340 = vunpack.c.l.b16 %v301
    %v341 = vunpack.c.l.b16 %v302
    %v342 = vunpack.c.l.b16 %v303
    %v343 = vunpack.c.l.b16 %v304
    %v344 = vunpack.c.l.b16 %v305
    %v345 = vunpack.c.l.b16 %v306
    %v346 = vunpack.c.l.b16 %v307
    %v347 = vunpack.c.l.b16 %v308
    %v348 = vunpack.c.l.b16 %v309
    %v349 = vunpack.c.l.b16 %v310
    %v350 = vpack.c.b16 %v335, %v334
    %v351 = vpack.c.b16 %v337, %v336
    %v352 = vpack.c.b16 %v339, %v338
    %v353 = vpack.c.b16 %v341, %v340
    %v354 = vpack.c.b16 %v343, %v342
    %v355 = vpack.c.b16 %v345, %v344
    %v356 = vpack.c.b16 %v347, %v346
    %v357 = vpack.c.b16 %v349, %v348
    %366 = vmatprep.subr.bf16.mxu0 0
    %367 = vmatpush1.bf16.msra.mxu0 %v350
    %368 = vmatprep.subr.bf16.mxu0 0
    %369 = vmatpush1.bf16.msra.mxu0 %v351
    %370 = vmatprep.subr.bf16.mxu0 0
    %371 = vmatpush1.bf16.msra.mxu0 %v352
    %372 = vmatprep.subr.bf16.mxu0 0
    %373 = vmatpush1.bf16.msra.mxu0 %v353
    %374 = vmatprep.subr.bf16.mxu0 0
    %375 = vmatpush1.bf16.msra.mxu0 %v354
    %376 = vmatprep.subr.bf16.mxu0 0
    %377 = vmatpush1.bf16.msra.mxu0 %v355
    %378 = vmatprep.subr.bf16.mxu0 0
    %379 = vmatpush1.bf16.msra.mxu0 %v356
    %380 = vmatprep.subr.bf16.mxu0 0
    %381 = vmatpush1.bf16.msra.mxu0 %v357
    %382 = vmatprep.subr.bf16.mxu0 0
    %383 = vmatpush1.bf16.msra.mxu0 0
    %384 = vmatprep.subr.bf16.mxu0 0
    %385 = vmatpush1.bf16.msra.mxu0 0
    %386 = vmatprep.subr.bf16.mxu0 0
    %387 = vmatpush1.bf16.msra.mxu0 0
    %388 = vmatprep.subr.bf16.mxu0 0
    %389 = vmatpush1.bf16.msra.mxu0 0
    %390 = vmatprep.subr.bf16.mxu0 0
    %391 = vmatpush1.bf16.msra.mxu0 0
    %392 = vmatprep.subr.bf16.mxu0 0
    %393 = vmatpush1.bf16.msra.mxu0 0
    %394 = vmatprep.subr.bf16.mxu0 0
    %395 = vmatpush1.bf16.msra.mxu0 0
    %396 = vmatprep.subr.bf16.mxu0 0
    %397 = vmatpush1.bf16.msra.mxu0 0
    %398 = vmatprep.mubr.bf16.mxu0 0
    %399 = vmatmul.mubr.bf16.gmra.mrb[0].mxu0 %v294
    %v400 = vpop.f32.mrb[0].mxu0
    %v401 = vadd.f32 %v316, %v400
    %v402 = vpop.f32.mrb[0].mxu0
    %v403 = vpop.f32.mrb[0].mxu0
    %v404 = vpop.f32.mrb[0].mxu0
    %405 = vdwg.mxu0
    %406 = vst [vmem:[%s7] sm:$0xff] %v401
    // Predicated region
    $region42: #{dqn_forward.1} parent=1 // pred_check
      _
    $region43: #{dqn_forward.1} parent=1 // pred_check_branch
      %408 = sbr.rel (0) target = $region45
    $region44: #{dqn_forward.1} parent=1 // pred_region
      _
    $region45: #{dqn_forward.1} parent=1 // pred_fallthru
      _
    // Predicated region
    $region46: #{dqn_forward.1} parent=1 // pred_check
      _
    $region47: #{dqn_forward.1} parent=1 // pred_check_branch
      %410 = sbr.rel (0) target = $region49
    $region48: #{dqn_forward.1} parent=1 // pred_region
      _
    $region49: #{dqn_forward.1} parent=1 // pred_fallthru
      _
    %411 = vsyncpa [#allocation3], 1
    %412 = vsyncpa [#allocation5], 1

</llo_original>
